<compile_context>
chip_gen: v6e
topology: v6e:2x2x1
jax: 0.10.0
libtpu: 0.0.40
codegen_flags: <defaults>
</compile_context>

<pallas_src>
import functools

import numpy as np
import jax
import jax.numpy as jnp
from jax.experimental import pallas as pl
from jax.experimental.pallas import tpu as pltpu


def _round_up(v, m):
    return ((v + m - 1) // m) * m


def _main_model_kernel(x_ref, w_ref, llm_ref, dist_ref, att_ref,
                       *, lamda, e_valid, e_pad):
    """One batch tile: adapter softmax -> blend with LLM -> row softmax."""
    # --- adapter model (linear head): softmax(x @ W) on the MXU -------------
    logits = jnp.dot(x_ref[...], w_ref[...],
                     preferred_element_type=jnp.float32)

    pad_mask = None
    if e_valid != e_pad:   # static: only compiled when E was lane-padded
        col = jax.lax.broadcasted_iota(jnp.int32, logits.shape, 1)
        pad_mask = col < e_valid
        logits = jnp.where(pad_mask, logits, -jnp.inf)

    m1 = jnp.max(logits, axis=-1, keepdims=True)
    e1 = jnp.exp(logits - m1)
    adapter = e1 * pl.reciprocal(jnp.sum(e1, axis=-1, keepdims=True),
                                 approx=True)

    # --- blend with LLM distribution (lamda = 0.5 in the torch module) ------
    dist = lamda * adapter + (1.0 - lamda) * llm_ref[...]
    dist_ref[...] = dist

    # --- turn_dis_target: row softmax of ent_distribution -------------------
    z = dist
    if pad_mask is not None:
        z = jnp.where(pad_mask, z, -jnp.inf)   # padded lanes never contribute
    m2 = jnp.max(z, axis=-1, keepdims=True)
    e2 = jnp.exp(z - m2)
    att_ref[...] = e2 * pl.reciprocal(jnp.sum(e2, axis=-1, keepdims=True),
                                      approx=True)


def main_model_forward(x, w, llm_dist, lamda=0.5, block_b=128):
    """Returns (ent_distribution [B,E], att_full [B,E]) as float32."""
    B, D = x.shape
    E = w.shape[1]

    # Lane-align E (multiple of 128); sublane-align the batch tile (mult of 8).
    e_pad = _round_up(E, 128)
    tb = _round_up(min(block_b, _round_up(B, 8)), 8)
    b_pad = _round_up(B, tb)
    nb = b_pad // tb

    # bf16 activations/weights into the MXU; distributions stay f32.
    x_p = jnp.zeros((b_pad, D), jnp.bfloat16).at[:B].set(x.astype(jnp.bfloat16))
    w_p = jnp.zeros((D, e_pad), jnp.bfloat16).at[:, :E].set(
        w.astype(jnp.bfloat16))
    llm_p = jnp.zeros((b_pad, e_pad), jnp.float32).at[:B, :E].set(
        llm_dist.astype(jnp.float32))

    kernel = functools.partial(_main_model_kernel,
                               lamda=float(lamda), e_valid=E, e_pad=e_pad)

    grid_spec = pltpu.PrefetchScalarGridSpec(
        num_scalar_prefetch=0,
        grid=(nb,),
        in_specs=[
            pl.BlockSpec((tb, D), lambda i: (i, 0)),       # x row tile
            pl.BlockSpec((D, e_pad), lambda i: (0, 0)),    # W (pinned in VMEM)
            pl.BlockSpec((tb, e_pad), lambda i: (i, 0)),   # llm row tile
        ],
        out_specs=[
            pl.BlockSpec((tb, e_pad), lambda i: (i, 0)),   # ent_distribution
            pl.BlockSpec((tb, e_pad), lambda i: (i, 0)),   # att (row softmax)
        ],
    )

    # Explicit VMEM budget: double-buffered tiles + pinned W + headroom.
    vmem_bytes = (2 * D * e_pad * 2                      # W (bf16), 2 buffers
                  + 2 * (tb * D * 2 + tb * e_pad * 4)    # x + llm input tiles
                  + 2 * 2 * (tb * e_pad * 4)             # two f32 output tiles
                  + (4 << 20))                           # headroom
    vmem_bytes = int(min(max(vmem_bytes, 16 << 20), 48 << 20))

    dist_p, att_p = pl.pallas_call(
        kernel,
        out_shape=(
            jax.ShapeDtypeStruct((b_pad, e_pad), jnp.float32),
            jax.ShapeDtypeStruct((b_pad, e_pad), jnp.float32),
        ),
        grid_spec=grid_spec,
        compiler_params=pltpu.CompilerParams(
            dimension_semantics=("parallel",),
            vmem_limit_bytes=vmem_bytes),
    )(x_p, w_p, llm_p)

    return dist_p[:B, :E], att_p[:B, :E]


def turn_dis_target(ent_distribution, att_full):
    """Vectorized host-side glue mirroring MainModel.turn_dis_target.

    Gathers per-row nonzero indices (row-major order, identical to the torch
    per-row loop) and renormalizes the kernel's full-row softmax over the
    nonzero subset, which exactly equals torch's softmax restricted to the
    nonzero entries.
    """
    ent_np = np.asarray(ent_distribution)
    att_np = np.asarray(att_full)
    mask = ent_np != 0.0
    rows, cols = np.nonzero(mask)                  # row-major == loop order
    denom = (att_np * mask).sum(axis=1)
    denom = np.where(denom == 0.0, 1.0, denom)
    entity_att_scores = att_np[rows, cols] / denom[rows]
    entities = np.stack([rows, cols], axis=1).astype(np.int64)
    return entity_att_scores, entities


if __name__ == "__main__":
    # small shapes: batch=2, adapter hidden dim=32, num entities=128
    B, D, E = 2, 32, 128
    key = jax.random.PRNGKey(0)
    kx, kw, kl = jax.random.split(key, 3)

    x = jax.random.normal(kx, (B, D), dtype=jnp.float32)
    # deterministic synthetic adapter weights (the torch module __init__ loads
    # external adapter/LLM checkpoints; here we init in-script)
    w = jax.random.normal(kw, (D, E), dtype=jnp.float32) * 0.1
    # synthetic batch_data['batch_LLM_result']: a probability distribution
    llm_logits = jax.random.normal(kl, (B, E), dtype=jnp.float32)
    llm_dist = jax.nn.softmax(llm_logits, axis=-1)

    ent_distribution, att_full = main_model_forward(x, w, llm_dist, lamda=0.5)
    jax.block_until_ready(ent_distribution)
    jax.block_until_ready(att_full)

    entity_att_scores, entities = turn_dis_target(ent_distribution, att_full)

    # sanity checks vs. a pure-JAX reference (bf16-rounded inputs, f32 acc);
    # tolerances cover bf16 matmul + approx reciprocal.
    x_bf = x.astype(jnp.bfloat16).astype(jnp.float32)
    w_bf = w.astype(jnp.bfloat16).astype(jnp.float32)
    adapter_ref = jax.nn.softmax(x_bf @ w_bf, axis=-1)
    dist_ref = 0.5 * adapter_ref + 0.5 * llm_dist
    att_ref = jax.nn.softmax(dist_ref, axis=-1)

    np.testing.assert_allclose(np.asarray(ent_distribution),
                               np.asarray(dist_ref), rtol=2e-2, atol=1e-4)
    np.testing.assert_allclose(np.asarray(att_full),
                               np.asarray(att_ref), rtol=2e-2, atol=1e-4)
    row_sums = np.asarray(att_full).sum(axis=-1)
    np.testing.assert_allclose(row_sums, np.ones(B), rtol=0, atol=1e-2)

    assert entities.shape == (B * E, 2)
    np.testing.assert_allclose(
        entity_att_scores.reshape(B, E).sum(axis=-1), np.ones(B),
        rtol=0, atol=1e-4)

    print("KERNEL_OK")
</pallas_src>

<mosaic_0001>
module attributes {stable_mosaic.version = 11 : i64} {
  func.func @_main_model_kernel(%arg0: i32, %arg1: memref<8x32xbf16, #tpu.memory_space<vmem>>, %arg2: memref<32x128xbf16, #tpu.memory_space<vmem>>, %arg3: memref<8x128xf32, #tpu.memory_space<vmem>>, %arg4: memref<8x128xf32, #tpu.memory_space<vmem>>, %arg5: memref<8x128xf32, #tpu.memory_space<vmem>>) attributes {dimension_semantics = [#tpu.dimension_semantics<parallel>], iteration_bounds = array<i64: 1>, scalar_prefetch = 0 : i64, scratch_operands = 0 : i64, tpu.core_type = #tpu.core_type<tc>, window_params = [{transform_indices = @transform_0, window_bounds = array<i64: 8, 32>}, {pipeline_mode = #tpu.pipeline_mode<synchronous>, transform_indices = @transform_1, window_bounds = array<i64: 32, 128>}, {transform_indices = @transform_2, window_bounds = array<i64: 8, 128>}, {transform_indices = @transform_3, window_bounds = array<i64: 8, 128>}, {transform_indices = @transform_4, window_bounds = array<i64: 8, 128>}]} {
    %c0 = arith.constant 0 : index
    %c0_0 = arith.constant 0 : index
    %0 = vector.load %arg1[%c0, %c0_0] : memref<8x32xbf16, #tpu.memory_space<vmem>>, vector<8x32xbf16>
    %c0_1 = arith.constant 0 : index
    %c0_2 = arith.constant 0 : index
    %1 = vector.load %arg2[%c0_1, %c0_2] : memref<32x128xbf16, #tpu.memory_space<vmem>>, vector<32x128xbf16>
    %cst = arith.constant dense<0.000000e+00> : vector<8x128xf32>
    %2 = tpu.matmul %0, %1, %cst {dimension_numbers = #tpu.dot_dimension_numbers<[1], [0], [0], [1], [0, 0, 1, 1], [], []>} : vector<8x32xbf16>, vector<32x128xbf16>, vector<8x128xf32> -> vector<8x128xf32>
    %cst_3 = arith.constant dense<0xFF800000> : vector<8xf32>
    %3 = vector.multi_reduction <maximumf>, %2, %cst_3 [1] : vector<8x128xf32> to vector<8xf32>
    %4 = vector.shape_cast %3 : vector<8xf32> to vector<8x1xf32>
    %5 = vector.broadcast %4 : vector<8x1xf32> to vector<8x128xf32>
    %6 = arith.subf %2, %5 : vector<8x128xf32>
    %7 = math.exp %6 : vector<8x128xf32>
    %cst_4 = arith.constant dense<0.000000e+00> : vector<8xf32>
    %8 = vector.multi_reduction <add>, %7, %cst_4 [1] : vector<8x128xf32> to vector<8xf32>
    %9 = vector.shape_cast %8 : vector<8xf32> to vector<8x1xf32>
    %10 = tpu.reciprocal %9 {approx = true} : vector<8x1xf32> -> vector<8x1xf32>
    %11 = vector.broadcast %10 : vector<8x1xf32> to vector<8x128xf32>
    %12 = arith.mulf %7, %11 : vector<8x128xf32>
    %cst_5 = arith.constant 5.000000e-01 : f32
    %13 = vector.broadcast %cst_5 : f32 to vector<8x128xf32>
    %14 = arith.mulf %13, %12 : vector<8x128xf32>
    %c0_6 = arith.constant 0 : index
    %c0_7 = arith.constant 0 : index
    %15 = vector.load %arg3[%c0_6, %c0_7] : memref<8x128xf32, #tpu.memory_space<vmem>>, vector<8x128xf32>
    %cst_8 = arith.constant 5.000000e-01 : f32
    %16 = vector.broadcast %cst_8 : f32 to vector<8x128xf32>
    %17 = arith.mulf %16, %15 : vector<8x128xf32>
    %18 = arith.addf %14, %17 : vector<8x128xf32>
    %c0_9 = arith.constant 0 : index
    %c0_10 = arith.constant 0 : index
    %19 = vector.load %arg4[%c0_9, %c0_10] : memref<8x128xf32, #tpu.memory_space<vmem>>, vector<8x128xf32>
    tpu.vector_store %arg4[%c0_9, %c0_10], %18 {strides = array<i32>} : memref<8x128xf32, #tpu.memory_space<vmem>>, vector<8x128xf32>,
    %cst_11 = arith.constant dense<0xFF800000> : vector<8xf32>
    %20 = vector.multi_reduction <maximumf>, %18, %cst_11 [1] : vector<8x128xf32> to vector<8xf32>
    %21 = vector.shape_cast %20 : vector<8xf32> to vector<8x1xf32>
    %22 = vector.broadcast %21 : vector<8x1xf32> to vector<8x128xf32>
    %23 = arith.subf %18, %22 : vector<8x128xf32>
    %24 = math.exp %23 : vector<8x128xf32>
    %cst_12 = arith.constant dense<0.000000e+00> : vector<8xf32>
    %25 = vector.multi_reduction <add>, %24, %cst_12 [1] : vector<8x128xf32> to vector<8xf32>
    %26 = vector.shape_cast %25 : vector<8xf32> to vector<8x1xf32>
    %27 = tpu.reciprocal %26 {approx = true} : vector<8x1xf32> -> vector<8x1xf32>
    %28 = vector.broadcast %27 : vector<8x1xf32> to vector<8x128xf32>
    %29 = arith.mulf %24, %28 : vector<8x128xf32>
    %c0_13 = arith.constant 0 : index
    %c0_14 = arith.constant 0 : index
    %30 = vector.load %arg5[%c0_13, %c0_14] : memref<8x128xf32, #tpu.memory_space<vmem>>, vector<8x128xf32>
    tpu.vector_store %arg5[%c0_13, %c0_14], %29 {strides = array<i32>} : memref<8x128xf32, #tpu.memory_space<vmem>>, vector<8x128xf32>,
    return
  }
  func.func @transform_0(%arg0: i32) -> (i32, i32) {
    %c0_i32 = arith.constant 0 : i32
    %c0_i32_0 = arith.constant 0 : i32
    return %arg0, %c0_i32 : i32, i32
  }
  func.func @transform_1(%arg0: i32) -> (i32, i32) {
    %c0_i32 = arith.constant 0 : i32
    %c0_i32_0 = arith.constant 0 : i32
    %c0_i32_1 = arith.constant 0 : i32
    return %c0_i32, %c0_i32_0 : i32, i32
  }
  func.func @transform_2(%arg0: i32) -> (i32, i32) {
    %c0_i32 = arith.constant 0 : i32
    %c0_i32_0 = arith.constant 0 : i32
    return %arg0, %c0_i32 : i32, i32
  }
  func.func @transform_3(%arg0: i32) -> (i32, i32) {
    %c0_i32 = arith.constant 0 : i32
    %c0_i32_0 = arith.constant 0 : i32
    return %arg0, %c0_i32 : i32, i32
  }
  func.func @transform_4(%arg0: i32) -> (i32, i32) {
    %c0_i32 = arith.constant 0 : i32
    %c0_i32_0 = arith.constant 0 : i32
    return %arg0, %c0_i32 : i32, i32
  }
}

</mosaic_0001>

<llo_original>
// kernel: tpu_custom_call.1
$region0: #{tpu_custom_call.1}
  #allocation0 [shape = 'u32[]', space=smem, size = 0x4, offset = 0x4, fixed_abs, tag = 'smem constant byte address 0x4 - core index']
  #allocation1 [shape = 'u32[144,128]{1,0:T(1,128)}', space=vmem, size = 0x12000, scoped, tag = 'internal scratch']
  %s0 = inlined_call_operand.hbm [shape: bf16[8,32], index: 0, kind: input, shape index: {}]
  %s1 = inlined_call_operand.hbm [shape: bf16[32,128], index: 1, kind: input, shape index: {}]
  %s2 = inlined_call_operand.hbm [shape: f32[8,128], index: 2, kind: input, shape index: {}]
  %s3 = inlined_call_operand.hbm [shape: f32[8,128], index: 3, kind: output, shape index: {0}]
  %s4 = inlined_call_operand.hbm [shape: f32[8,128], index: 4, kind: output, shape index: {1}]
  %5 = xla_tuple %s3, %s4
  %s6 = sld [smem:[#allocation0]]
  $region42: #{tpu_custom_call.1} parent=0
    _
  %s8 = ssub.s32 1, %s6
  %s9 = scalar_select 0, %s8, %s6
  $region1: #{tpu_custom_call.1} parent=0
    #allocation2 [shape = 'u8[2048]{0}', space=vmem, size = 0x800, scoped, tag = 'input window, operand 0, single buffered']
    #allocation3 [shape = 's32[1]{0}', space=sflag, size = 0x4, scoped, tag = 'scoped memory for tpu_custom_call.1']
    #allocation4 [shape = 's32[1]{0}', space=sflag, size = 0x4, scoped, tag = 'scoped memory for tpu_custom_call.1']
    #allocation5 [shape = 'u8[8192]{0}', space=vmem, size = 0x2000, scoped, tag = 'input window, operand 1, single buffered']
    #allocation6 [shape = 's32[1]{0}', space=sflag, size = 0x4, scoped, tag = 'scoped memory for tpu_custom_call.1']
    #allocation7 [shape = 'u8[4096]{0}', space=vmem, size = 0x1000, scoped, tag = 'input window, operand 2, single buffered']
    #allocation8 [shape = 'u8[4096]{0}', space=vmem, size = 0x1000, scoped, tag = 'output window, operand 0, single buffered']
    #allocation9 [shape = 'u8[4096]{0}', space=vmem, size = 0x1000, scoped, tag = 'output window, operand 1, single buffered']
    #allocation10 [shape = 's32[1]{0}', space=sflag, size = 0x4, scoped, tag = 'scoped memory for tpu_custom_call.1']
    %10 = vsyncpa [#allocation3], 0
    %11 = vsyncpa [#allocation6], 0
    %12 = vsyncpa [#allocation4], 0
    %13 = vsyncpa [#allocation10], 0
    // Predicated region
    $region2: #{tpu_custom_call.1} parent=1 // pred_check
      _
    $region3: #{tpu_custom_call.1} parent=1 // pred_check_branch
      %15 = sbr.rel (0) target = $region5
    $region4: #{tpu_custom_call.1} parent=1 // pred_region
      %s17 = ssub.s32 64, 64
      %18 = vsyncadd [#allocation3], %s17
      %s20 = sshll.u32 [#allocation2], 4
      %s21 = int_to_ptr.vmem [resolvable:$true] %s20
      %23 = dma.hbm_to_vmem [thread:$0]  %s0, 64, %s21, [#allocation3]
    $region5: #{tpu_custom_call.1} parent=1 // pred_fallthru
      _
    // Predicated region
    $region6: #{tpu_custom_call.1} parent=1 // pred_check
      _
    $region7: #{tpu_custom_call.1} parent=1 // pred_check_branch
      %25 = sbr.rel (0) target = $region9
    $region8: #{tpu_custom_call.1} parent=1 // pred_region
      %s27 = ssub.s32 256, 256
      %28 = vsyncadd [#allocation6], %s27
      %s29 = sshll.u32 [#allocation5], 4
      %s30 = int_to_ptr.vmem [resolvable:$true] %s29
      %35 = dma.hbm_to_vmem [thread:$0]  %s1, 256, %s30, [#allocation6], 64, 64, 4
    $region9: #{tpu_custom_call.1} parent=1 // pred_fallthru
      _
    // Predicated region
    $region10: #{tpu_custom_call.1} parent=1 // pred_check
      _
    $region11: #{tpu_custom_call.1} parent=1 // pred_check_branch
      %37 = sbr.rel (0) target = $region13
    $region12: #{tpu_custom_call.1} parent=1 // pred_region
      %s39 = ssub.s32 128, 128
      %40 = vsyncadd [#allocation6], %s39
      %s42 = sshll.u32 [#allocation7], 4
      %s43 = int_to_ptr.vmem [resolvable:$true] %s42
      %45 = dma.hbm_to_vmem [thread:$0]  %s2, 128, %s43, [#allocation6]
    $region13: #{tpu_custom_call.1} parent=1 // pred_fallthru
      _
    // Predicated region
    $region14: #{tpu_custom_call.1} parent=1 // pred_check
      _
    $region15: #{tpu_custom_call.1} parent=1 // pred_check_branch
      %47 = sbr.rel (0) target = $region17
    $region16: #{tpu_custom_call.1} parent=1 // pred_region
      %48 = dma.done [#allocation3], 64
    $region17: #{tpu_custom_call.1} parent=1 // pred_fallthru
      _
    // Predicated region
    $region18: #{tpu_custom_call.1} parent=1 // pred_check
      _
    $region19: #{tpu_custom_call.1} parent=1 // pred_check_branch
      %50 = sbr.rel (0) target = $region21
    $region20: #{tpu_custom_call.1} parent=1 // pred_region
      %51 = dma.done [#allocation6], 256
    $region21: #{tpu_custom_call.1} parent=1 // pred_fallthru
      _
    // Predicated region
    $region22: #{tpu_custom_call.1} parent=1 // pred_check
      _
    $region23: #{tpu_custom_call.1} parent=1 // pred_check_branch
      %53 = sbr.rel (0) target = $region25
    $region24: #{tpu_custom_call.1} parent=1 // pred_region
      %54 = dma.done [#allocation6], 128
    $region25: #{tpu_custom_call.1} parent=1 // pred_fallthru
      _
    %v56 = vld [vmem:[#allocation2] sm:$0xf]
    %v57 = vld [vmem:[#allocation5] sm:$0xf]
    %v58 = vld [vmem:[#allocation5 + $0x4] sm:$0xf]
    %v59 = vld [vmem:[#allocation5 + $0x8] sm:$0xf]
    %v60 = vld [vmem:[#allocation5 + $0xc] sm:$0xf]
    %v65 = vunpack.c.l.b16 %v57
    %v66 = vunpack.c.l.b16 %v58
    %v67 = vunpack.c.l.b16 %v59
    %v68 = vunpack.c.l.b16 %v60
    %v69 = vpack.c.b16 %v66, %v65
    %v70 = vpack.c.b16 %v68, %v67
    %vm73 = vcmask 261120
    %v75 = vsel %vm73, %v56, 0
    %77 = vmatprep.subr.bf16.mxu0 0
    %78 = vmatpush1.bf16.msra.mxu0 0
    %79 = vmatprep.subr.bf16.mxu0 0
    %80 = vmatpush1.bf16.msra.mxu0 0
    %81 = vmatprep.subr.bf16.mxu0 0
    %82 = vmatpush1.bf16.msra.mxu0 0
    %83 = vmatprep.subr.bf16.mxu0 0
    %84 = vmatpush1.bf16.msra.mxu0 0
    %85 = vmatprep.subr.bf16.mxu0 0
    %86 = vmatpush1.bf16.msra.mxu0 0
    %87 = vmatprep.subr.bf16.mxu0 0
    %88 = vmatpush1.bf16.msra.mxu0 0
    %89 = vmatprep.subr.bf16.mxu0 0
    %90 = vmatpush1.bf16.msra.mxu0 %v70
    %91 = vmatprep.subr.bf16.mxu0 0
    %92 = vmatpush1.bf16.msra.mxu0 %v69
    %93 = vmatprep.subr.bf16.mxu0 0
    %94 = vmatpush2.bf16.msra.mxu0 0
    %95 = vmatprep.subr.bf16.mxu0 0
    %96 = vmatpush2.bf16.msra.mxu0 0
    %97 = vmatprep.subr.bf16.mxu0 0
    %98 = vmatpush2.bf16.msra.mxu0 0
    %99 = vmatprep.subr.bf16.mxu0 0
    %100 = vmatpush2.bf16.msra.mxu0 0
    %101 = vmatprep.subr.bf16.mxu0 0
    %102 = vmatpush2.bf16.msra.mxu0 0
    %103 = vmatprep.subr.bf16.mxu0 0
    %104 = vmatpush2.bf16.msra.mxu0 0
    %105 = vmatprep.subr.bf16.mxu0 0
    %106 = vmatpush2.bf16.msra.mxu0 0
    %107 = vmatprep.subr.bf16.mxu0 0
    %108 = vmatpush2.bf16.msra.mxu0 0
    %109 = vmatprep.mubr.bf16.mxu0 0
    %110 = vmatmul.mubr.bf16.gmra.mxu0 %v75
    %v111 = vpop.f32.mrf.mxu0
    %v112 = vadd.f32 0.0, %v111
    %v113 = vpop.f32.mrf.mxu0
    %v114 = vpop.f32.mrf.mxu0
    %v115 = vpop.f32.mrf.mxu0
    %116 = vdwg.mxu0
    %117 = vmax.xlane.f32.xlu0 %v112
    %v118 = vpop.xlane.xlu0 %117
    %v119 = vsub.f32 %v112, %v118
    %v120 = vmul.f32 %v119, 1.442695
    %v121 = vpow.pop %v120
    %122 = vadd.xlane.f32.xlu0 %v121
    %v123 = vpop.xlane.xlu0 %122
    %v124 = vrcp.pop %v123
    %v125 = vmul.f32 %v121, %v124
    %v126 = vmul.f32 %v125, 0.5
    %v127 = vld [vmem:[#allocation7] sm:$0xff]
    %v128 = vmul.f32 %v127, 0.5
    %v129 = vadd.f32 %v126, %v128
    %130 = vst [vmem:[#allocation8] sm:$0xff] %v129
    %131 = vmax.xlane.f32.xlu0 %v129
    %v132 = vpop.xlane.xlu0 %131
    %v133 = vsub.f32 %v129, %v132
    %v134 = vmul.f32 %v133, 1.442695
    %v135 = vpow.pop %v134
    %136 = vadd.xlane.f32.xlu0 %v135
    %v137 = vpop.xlane.xlu0 %136
    %v138 = vrcp.pop %v137
    %v139 = vmul.f32 %v135, %v138
    %140 = vst [vmem:[#allocation9] sm:$0xff] %v139
    // Predicated region
    $region26: #{tpu_custom_call.1} parent=1 // pred_check
      _
    $region27: #{tpu_custom_call.1} parent=1 // pred_check_branch
      %142 = sbr.rel (0) target = $region29
    $region28: #{tpu_custom_call.1} parent=1 // pred_region
      %s144 = ssub.s32 128, 128
      %145 = vsyncadd [#allocation4], %s144
      %s147 = sshll.u32 [#allocation8], 4
      %s148 = int_to_ptr.vmem [resolvable:$true] %s147
      %150 = dma.vmem_to_hbm [thread:$0]  %s148, 128, %s3, [#allocation4]
    $region29: #{tpu_custom_call.1} parent=1 // pred_fallthru
      _
    // Predicated region
    $region30: #{tpu_custom_call.1} parent=1 // pred_check
      _
    $region31: #{tpu_custom_call.1} parent=1 // pred_check_branch
      %152 = sbr.rel (0) target = $region33
    $region32: #{tpu_custom_call.1} parent=1 // pred_region
      %s154 = ssub.s32 128, 128
      %155 = vsyncadd [#allocation10], %s154
      %s157 = sshll.u32 [#allocation9], 4
      %s158 = int_to_ptr.vmem [resolvable:$true] %s157
      %160 = dma.vmem_to_hbm [thread:$0]  %s158, 128, %s4, [#allocation10]
    $region33: #{tpu_custom_call.1} parent=1 // pred_fallthru
      _
    // Predicated region
    $region34: #{tpu_custom_call.1} parent=1 // pred_check
      _
    $region35: #{tpu_custom_call.1} parent=1 // pred_check_branch
      %162 = sbr.rel (0) target = $region37
    $region36: #{tpu_custom_call.1} parent=1 // pred_region
      %163 = dma.done [#allocation4], 128
    $region37: #{tpu_custom_call.1} parent=1 // pred_fallthru
      _
    // Predicated region
    $region38: #{tpu_custom_call.1} parent=1 // pred_check
      _
    $region39: #{tpu_custom_call.1} parent=1 // pred_check_branch
      %165 = sbr.rel (0) target = $region41
    $region40: #{tpu_custom_call.1} parent=1 // pred_region
      %166 = dma.done [#allocation10], 128
    $region41: #{tpu_custom_call.1} parent=1 // pred_fallthru
      _
    %167 = vsyncpa [#allocation3], 1
    %168 = vsyncpa [#allocation6], 1
    %169 = vsyncpa [#allocation4], 1
    %170 = vsyncpa [#allocation10], 1

</llo_original>
